<compile_context>
chip_gen: v7x
topology: tpu7x:2x2x1
jax: 0.10.0
libtpu: 0.0.40
codegen_flags: <defaults>
</compile_context>

<pallas_src>
import functools
import math

import jax
import jax.numpy as jnp
from jax import lax
from jax.experimental import pallas as pl
from jax.experimental.pallas import tpu as pltpu

_LANE = 128
_MAX_FALLBACK_COLS = 4096


# ---------------------------------------------------------------------------------------------
# Canonical lane-dense 2-D view (shared by input, target and mask).
# ---------------------------------------------------------------------------------------------
def _plan_2d(shape):
    """Return (rows, cols, pad_elems) describing the lane-dense 2-D view of `shape`."""
    size = int(math.prod(shape)) if len(shape) else 1
    for c in (4096, 2048, 1024, 512, 256, 128):
        if size % c == 0:
            return size // c, c, 0
    # Fallback: flatten, zero-pad to a multiple of 128 (exact: padded mask is zero) and use a
    # bounded-width view so block width can never explode.
    padded = ((size + _LANE - 1) // _LANE) * _LANE
    cols = _LANE
    while cols < _MAX_FALLBACK_COLS and padded % (cols * 2) == 0:
        cols *= 2
    return padded // cols, cols, padded - size


def _to_2d(a, rows, cols, pad_elems):
    if pad_elems:
        a = jnp.pad(a.reshape(-1), (0, pad_elems))
    return a.reshape(rows, cols)


def _device_defaults():
    """(target_block_bytes per input stream, num_parallel) per TPU generation."""
    try:
        kind = jax.devices()[0].device_kind.lower()
    except Exception:
        kind = ""
    if "v7" in kind:
        # 2 TCs, 3.2 TB/s. 2 MiB/stream keeps buffers + elementwise temporaries comfortably
        # inside the 64 MiB physical VMEM while amortizing the ~0.35 us step overhead.
        return 2 << 20, 2
    if "v6" in kind:
        return 2 << 20, 1
    return 1 << 20, 1            # v5e / unknown: stay well inside the 16 MiB scoped default


# ---------------------------------------------------------------------------------------------
# Kernel: masked sum of squared errors accumulated into a VMEM-resident (1, acc_rows, cols)
# output block that is revisited across the "arbitrary" grid axis.
# ---------------------------------------------------------------------------------------------
def _masked_sse_kernel(x_ref, t_ref, m_ref, acc_ref, *, n_steps, total_tiles, row_tile,
                       valid_tail_rows, acc_rows):
    p = pl.program_id(0)
    j = pl.program_id(1)

    @pl.when(j == 0)
    def _init():
        acc_ref[...] = jnp.zeros_like(acc_ref)

    x = x_ref[...].astype(jnp.float32)
    t = t_ref[...].astype(jnp.float32)
    m = m_ref[...].astype(jnp.float32)
    d = x - t
    contrib = m * d * d                                    # (row_tile, cols)

    def _accumulate(c):
        if acc_rows == 8:
            if row_tile > 8:
                # Split at sublane granularity; sum across row groups = plain vreg adds.
                c = jnp.sum(c.reshape(row_tile // 8, 8, c.shape[-1]), axis=0)
        else:
            c = jnp.sum(c, axis=0, keepdims=True)          # tiny single-block inputs only
        acc_ref[...] += c.reshape(acc_ref.shape)

    if valid_tail_rows is None:                            # static: row_tile divides rows
        _accumulate(contrib)
    else:
        tile_idx = p * n_steps + j
        is_tail = tile_idx == total_tiles - 1

        @pl.when(tile_idx < total_tiles - 1)
        def _full():
            _accumulate(contrib)

        @pl.when(is_tail)
        def _tail():
            # Rows past the array end hold unspecified data in the VMEM block; select them
            # out (jnp.where is a select, so NaN/Inf garbage cannot leak through).
            row_ids = lax.broadcasted_iota(jnp.int32, contrib.shape, 0)
            _accumulate(jnp.where(row_ids < valid_tail_rows, contrib, 0.0))


# ---------------------------------------------------------------------------------------------
# Wrapper.
# ---------------------------------------------------------------------------------------------
def _masked_sse_2d(x, t, m, *, target_block_bytes=None, num_parallel=None):
    """sum(m * (x - t)**2) for same-shape, lane-dense 2-D arrays via one pallas_call."""
    assert x.ndim == 2 and x.shape == t.shape == m.shape
    rows, cols = x.shape

    dflt_bytes, dflt_par = _device_defaults()
    if target_block_bytes is None:
        target_block_bytes = dflt_bytes
    if num_parallel is None:
        num_parallel = dflt_par

    # Row-tile sizing from the widest stream's itemsize (bf16/int8 streams keep the full budget).
    itemsize = max(a.dtype.itemsize for a in (x, t, m))
    max_rows = max(8, target_block_bytes // (cols * itemsize))
    if rows <= max_rows:
        row_tile = rows                                     # whole array is a single block
    else:
        row_tile = max(32, (max_rows // 32) * 32)           # 32: legal sublane tiling for int8
    total_tiles = -(-rows // row_tile)

    # Use the "parallel" axis only when it splits the tiles evenly with >= 2 steps per core.
    if num_parallel and num_parallel > 1 and total_tiles % num_parallel == 0 \
            and total_tiles >= 2 * num_parallel:
        n_par = int(num_parallel)
    else:
        n_par = 1
    n_steps = total_tiles // n_par

    tail = rows - (total_tiles - 1) * row_tile
    valid_tail_rows = None if tail == row_tile else tail
    acc_rows = 8 if row_tile % 8 == 0 else 1

    kernel = functools.partial(
        _masked_sse_kernel, n_steps=n_steps, total_tiles=total_tiles, row_tile=row_tile,
        valid_tail_rows=valid_tail_rows, acc_rows=acc_rows)

    in_spec = pl.BlockSpec((row_tile, cols), lambda p, j: (p * n_steps + j, 0))
    out_spec = pl.BlockSpec((1, acc_rows, cols), lambda p, j: (p, 0, 0))

    in_block_bytes = sum(row_tile * cols * a.dtype.itemsize for a in (x, t, m))
    f32_block = row_tile * cols * 4
    out_bytes = n_par * acc_rows * cols * 4
    vmem_limit = int(min(max(2 * in_block_bytes + 6 * f32_block + 4 * out_bytes + (2 << 20),
                             32 << 20), 56 << 20))
    cost = pl.CostEstimate(
        flops=3 * rows * cols, transcendentals=0,
        bytes_accessed=int(sum(a.size * a.dtype.itemsize for a in (x, t, m))) + out_bytes)

    partials = pl.pallas_call(
        kernel,
        out_shape=jax.ShapeDtypeStruct((n_par, acc_rows, cols), jnp.float32),
        grid_spec=pltpu.PrefetchScalarGridSpec(
            num_scalar_prefetch=0,
            grid=(n_par, n_steps),
            in_specs=[in_spec, in_spec, in_spec],
            out_specs=out_spec,
        ),
        compiler_params=pltpu.CompilerParams(
            dimension_semantics=("parallel", "arbitrary"),
            vmem_limit_bytes=vmem_limit),
        cost_estimate=cost,
    )(x, t, m)

    # Tiny (n_par * acc_rows * cols elements) final combine outside the kernel.
    return jnp.sum(partials)


def masked_sse(inp, target, mask, **kwargs):
    """sum(mask * (inp - target)**2) via the Pallas kernel (numerator only)."""
    inp, target, mask = jnp.asarray(inp), jnp.asarray(target), jnp.asarray(mask)
    assert inp.shape == target.shape == mask.shape, "shapes must match"
    rows, cols, pad = _plan_2d(inp.shape)
    return _masked_sse_2d(_to_2d(inp, rows, cols, pad),
                          _to_2d(target, rows, cols, pad),
                          _to_2d(mask, rows, cols, pad), **kwargs)


def masked_mse_loss(inp, target, mask, **kwargs):
    """Functional equivalent of functional_MaskedMSELoss."""
    num = masked_sse(inp, target, mask, **kwargs)
    denom = jnp.sum(jnp.asarray(mask).astype(jnp.float32))
    return num / denom                      # NaN/Inf if sum(mask) == 0, matching PyTorch


class MaskedMSELoss:
    """Mirrors the PyTorch module: mask fixed at construction; sum(mask), the lane-dense view
    and the int8 downcast of the mask are all prepared once in __init__."""
    # TODO(synk): autograd (mask.requires_grad_(False)) has no kernel-side equivalent; forward only.

    def __init__(self, mask):
        mask = jnp.asarray(mask)
        self.mask = mask
        self.nonzero = jnp.sum(mask.astype(jnp.float32))
        self._shape = mask.shape
        self._plan = _plan_2d(mask.shape)
        # Stream the mask as int8 when exactly representable (binary masks): 4B -> 1B/elem.
        m32 = mask.astype(jnp.float32)
        m8 = m32.astype(jnp.int8)
        stream = m8 if bool(jnp.all(m8.astype(jnp.float32) == m32)) else mask
        rows, cols, pad = self._plan
        self._mask2d = _to_2d(stream, rows, cols, pad)

        def _loss(a, b, m2d, nz):
            num = _masked_sse_2d(_to_2d(a, rows, cols, pad),
                                 _to_2d(b, rows, cols, pad), m2d)
            return num / nz

        self._jit = jax.jit(_loss)          # reshape becomes a free layout bitcast under jit

    def __call__(self, inp, target, **kwargs):
        inp, target = jnp.asarray(inp), jnp.asarray(target)
        assert inp.shape == self._shape and target.shape == self._shape
        if kwargs:                          # tuning / test path (static kwargs), run eagerly
            rows, cols, pad = self._plan
            num = _masked_sse_2d(_to_2d(inp, rows, cols, pad),
                                 _to_2d(target, rows, cols, pad),
                                 self._mask2d, **kwargs)
            return num / self.nonzero
        return self._jit(inp, target, self._mask2d, self.nonzero)


if __name__ == "__main__":
    key = jax.random.PRNGKey(0)
    k = jax.random.split(key, 8)

    # (a) Autoencoder-style: batch=8, features=256 -> single block, int8 mask stream.
    x = jax.random.normal(k[0], (8, 256), dtype=jnp.float32)
    t = jax.random.normal(k[1], (8, 256), dtype=jnp.float32)
    mask = (jax.random.uniform(k[2], (8, 256)) > 0.5).astype(jnp.float32)
    crit = MaskedMSELoss(mask)
    loss = jax.block_until_ready(crit(x, t))
    ref = jnp.sum(mask * (x - t) ** 2) / jnp.sum(mask)
    assert jnp.allclose(loss, ref, rtol=1e-5, atol=1e-6), (loss, ref)

    # (b) Docstring example from the PyTorch module (4 x 13 -> fallback padded 1x128 view).
    ones = jnp.ones((4, 13), jnp.float32)
    tgt = ones.at[1].set(0.0).at[3].set(0.0)
    msk = ones.at[1].set(0.0)
    crit2 = MaskedMSELoss(msk)
    l_a = jax.block_until_ready(crit2(ones, ones.at[1].set(0.0)))
    l_b = jax.block_until_ready(crit2(ones, tgt))
    assert jnp.allclose(l_a, 0.0, atol=1e-6), l_a
    assert jnp.allclose(l_b, 1.0 / 3.0, rtol=1e-5), l_b

    # (c) Ragged multi-tile case: exercises in-kernel tail masking (no jnp.pad pre-pass).
    x2 = jax.random.normal(k[3], (260, 384), dtype=jnp.float32)
    t2 = jax.random.normal(k[4], (260, 384), dtype=jnp.float32)
    m2 = (jax.random.uniform(k[5], (260, 384)) > 0.3).astype(jnp.float32)
    loss2 = jax.block_until_ready(
        masked_mse_loss(x2, t2, m2, target_block_bytes=64 * 1024, num_parallel=2))
    ref2 = jnp.sum(m2 * (x2 - t2) ** 2) / jnp.sum(m2)
    assert jnp.allclose(loss2, ref2, rtol=1e-4, atol=1e-5), (loss2, ref2)

    # (d) Even tile count: exercises the 2-way "parallel" split, (8, cols) accumulator and
    #     int8 mask streaming on a multi-step grid with bf16 inputs.
    x3 = jax.random.normal(k[6], (1024, 512), dtype=jnp.bfloat16)
    t3 = jax.random.normal(k[7], (1024, 512), dtype=jnp.bfloat16)
    m3 = (jax.random.uniform(k[2], (1024, 512)) > 0.5).astype(jnp.float32)
    crit3 = MaskedMSELoss(m3)
    loss3 = jax.block_until_ready(
        crit3(x3, t3, target_block_bytes=64 * 1024, num_parallel=2))
    ref3 = jnp.sum(m3 * (x3.astype(jnp.float32) - t3.astype(jnp.float32)) ** 2) / jnp.sum(m3)
    assert jnp.allclose(loss3, ref3, rtol=1e-3, atol=1e-4), (loss3, ref3)

    print("KERNEL_OK")
</pallas_src>

<mosaic_0001>
module attributes {stable_mosaic.version = 11 : i64} {
  func.func @_masked_sse_kernel(%arg0: i32, %arg1: i32, %arg2: memref<1x2048xf32, #tpu.memory_space<vmem>>, %arg3: memref<1x2048xf32, #tpu.memory_space<vmem>>, %arg4: memref<1x2048xi8, #tpu.memory_space<vmem>>, %arg5: memref<1x1x2048xf32, #tpu.memory_space<vmem>>) attributes {dimension_semantics = [#tpu.dimension_semantics<parallel>, #tpu.dimension_semantics<arbitrary>], iteration_bounds = array<i64: 1, 1>, scalar_prefetch = 0 : i64, scratch_operands = 0 : i64, tpu.core_type = #tpu.core_type<tc>, window_params = [{transform_indices = @transform_0, window_bounds = array<i64: 1, 2048>}, {transform_indices = @transform_1, window_bounds = array<i64: 1, 2048>}, {transform_indices = @transform_2, window_bounds = array<i64: 1, 2048>}, {transform_indices = @transform_3, window_bounds = array<i64: 1, 1, 2048>}]} {
    %c0_i32 = arith.constant 0 : i32
    %0 = arith.cmpi eq, %arg1, %c0_i32 : i32
    %1 = arith.extui %0 : i1 to i32
    %c0_i32_0 = arith.constant 0 : i32
    %2 = arith.cmpi ne, %1, %c0_i32_0 : i32
    scf.if %2 {
      %cst_12 = arith.constant 0.000000e+00 : f32
      %16 = vector.broadcast %cst_12 : f32 to vector<1x1x2048xf32>
      %c0_13 = arith.constant 0 : index
      %c0_14 = arith.constant 0 : index
      %c0_15 = arith.constant 0 : index
      %17 = vector.load %arg5[%c0_13, %c0_14, %c0_15] : memref<1x1x2048xf32, #tpu.memory_space<vmem>>, vector<1x1x2048xf32>
      tpu.vector_store %arg5[%c0_13, %c0_14, %c0_15], %16 {strides = array<i32>} : memref<1x1x2048xf32, #tpu.memory_space<vmem>>, vector<1x1x2048xf32>,
    } else {
    }
    %c0 = arith.constant 0 : index
    %c0_1 = arith.constant 0 : index
    %3 = vector.load %arg2[%c0, %c0_1] : memref<1x2048xf32, #tpu.memory_space<vmem>>, vector<1x2048xf32>
    %c0_2 = arith.constant 0 : index
    %c0_3 = arith.constant 0 : index
    %4 = vector.load %arg3[%c0_2, %c0_3] : memref<1x2048xf32, #tpu.memory_space<vmem>>, vector<1x2048xf32>
    %c0_4 = arith.constant 0 : index
    %c0_5 = arith.constant 0 : index
    %5 = vector.load %arg4[%c0_4, %c0_5] : memref<1x2048xi8, #tpu.memory_space<vmem>>, vector<1x2048xi8>
    %6 = arith.sitofp %5 : vector<1x2048xi8> to vector<1x2048xf32>
    %7 = arith.subf %3, %4 : vector<1x2048xf32>
    %8 = arith.mulf %6, %7 : vector<1x2048xf32>
    %9 = arith.mulf %8, %7 : vector<1x2048xf32>
    %cst = arith.constant dense<0.000000e+00> : vector<2048xf32>
    %10 = vector.multi_reduction <add>, %9, %cst [0] : vector<1x2048xf32> to vector<2048xf32>
    %11 = vector.shape_cast %10 : vector<2048xf32> to vector<1x2048xf32>
    %c0_6 = arith.constant 0 : index
    %c0_7 = arith.constant 0 : index
    %c0_8 = arith.constant 0 : index
    %12 = vector.load %arg5[%c0_6, %c0_7, %c0_8] : memref<1x1x2048xf32, #tpu.memory_space<vmem>>, vector<1x1x2048xf32>
    %13 = vector.shape_cast %11 : vector<1x2048xf32> to vector<1x1x2048xf32>
    %14 = arith.addf %12, %13 : vector<1x1x2048xf32>
    %c0_9 = arith.constant 0 : index
    %c0_10 = arith.constant 0 : index
    %c0_11 = arith.constant 0 : index
    %15 = vector.load %arg5[%c0_9, %c0_10, %c0_11] : memref<1x1x2048xf32, #tpu.memory_space<vmem>>, vector<1x1x2048xf32>
    tpu.vector_store %arg5[%c0_9, %c0_10, %c0_11], %14 {strides = array<i32>} : memref<1x1x2048xf32, #tpu.memory_space<vmem>>, vector<1x1x2048xf32>,
    return
  }
  func.func @transform_0(%arg0: i32, %arg1: i32) -> (i32, i32) {
    %c1_i32 = arith.constant 1 : i32
    %0 = arith.muli %arg0, %c1_i32 : i32
    %1 = arith.addi %0, %arg1 : i32
    %c0_i32 = arith.constant 0 : i32
    %c0_i32_0 = arith.constant 0 : i32
    return %1, %c0_i32 : i32, i32
  }
  func.func @transform_1(%arg0: i32, %arg1: i32) -> (i32, i32) {
    %c1_i32 = arith.constant 1 : i32
    %0 = arith.muli %arg0, %c1_i32 : i32
    %1 = arith.addi %0, %arg1 : i32
    %c0_i32 = arith.constant 0 : i32
    %c0_i32_0 = arith.constant 0 : i32
    return %1, %c0_i32 : i32, i32
  }
  func.func @transform_2(%arg0: i32, %arg1: i32) -> (i32, i32) {
    %c1_i32 = arith.constant 1 : i32
    %0 = arith.muli %arg0, %c1_i32 : i32
    %1 = arith.addi %0, %arg1 : i32
    %c0_i32 = arith.constant 0 : i32
    %c0_i32_0 = arith.constant 0 : i32
    return %1, %c0_i32 : i32, i32
  }
  func.func @transform_3(%arg0: i32, %arg1: i32) -> (i32, i32, i32) {
    %c0_i32 = arith.constant 0 : i32
    %c0_i32_0 = arith.constant 0 : i32
    %c0_i32_1 = arith.constant 0 : i32
    return %arg0, %c0_i32, %c0_i32_0 : i32, i32, i32
  }
}

</mosaic_0001>

<llo_original>
// kernel: _loss.1
$region0: #{_loss.1}
  #allocation0 [shape = 'u32[]', space=smem, size = 0x4, offset = 0x4, fixed_abs, tag = 'smem constant byte address 0x4 - core index']
  #allocation1 [shape = 'u32[144,128]{1,0:T(1,128)}', space=vmem, size = 0x12000, scoped, tag = 'internal scratch']
  %s0 = inlined_call_operand.vmem [shape: f32[1,2048], index: 0, kind: input, shape index: {}]
  %s1 = inlined_call_operand.vmem [shape: f32[1,2048], index: 1, kind: input, shape index: {}]
  %s2 = inlined_call_operand.vmem [shape: s8[1,2048], index: 2, kind: input, shape index: {}]
  %s3 = inlined_call_operand.vmem [shape: f32[1,1,2048], index: 3, kind: output, shape index: {}]
  %s4 = sld [smem:[#allocation0]]
  $region26: #{_loss.1} parent=0
    _
  %s6 = ssub.s32 1, %s4
  %s7 = scalar_select 0, %s6, %s4
  // Predicated region
  $region2: #{_loss.1} parent=0 // pred_check
    _
  $region3: #{_loss.1} parent=0 // pred_check_branch
    %9 = sbr.rel (0) target = $region5
  $region4: #{_loss.1} parent=0 // pred_region
    %s10 = sadd.s32 0, 0
    %p11 = scmp.lt.s32.totalorder %s10, 0
    %s12 = scalar_select %p11, %s10, 0
    %s13 = smul.addr %s12, 16
    %s14 = scalar_lea.vmem %s0, %s13
    %s15 = sadd.s32 0, 0
  $region5: #{_loss.1} parent=0 // pred_fallthru
    _
  // Predicated region
  $region6: #{_loss.1} parent=0 // pred_check
    _
  $region7: #{_loss.1} parent=0 // pred_check_branch
    %17 = sbr.rel (0) target = $region9
  $region8: #{_loss.1} parent=0 // pred_region
    %s18 = sadd.s32 0, 0
    %p19 = scmp.lt.s32.totalorder %s18, 0
    %s20 = scalar_select %p19, %s18, 0
    %s21 = smul.addr %s20, 16
    %s22 = scalar_lea.vmem %s1, %s21
    %s23 = sadd.s32 0, 0
  $region9: #{_loss.1} parent=0 // pred_fallthru
    _
  // Predicated region
  $region10: #{_loss.1} parent=0 // pred_check
    _
  $region11: #{_loss.1} parent=0 // pred_check_branch
    %25 = sbr.rel (0) target = $region13
  $region12: #{_loss.1} parent=0 // pred_region
    %s26 = sadd.s32 0, 0
    %p27 = scmp.lt.s32.totalorder %s26, 0
    %s28 = scalar_select %p27, %s26, 0
    %s29 = smul.addr %s28, 16
    %s30 = scalar_lea.vmem %s2, %s29
    %s31 = sadd.s32 0, 0
  $region13: #{_loss.1} parent=0 // pred_fallthru
    _
  %s32 = sadd.s32 0, 0
  %p33 = scmp.lt.s32.totalorder %s32, 0
  %s34 = scalar_select %p33, %s32, 0
  %s35 = smul.addr %s34, 16
  %s36 = scalar_lea.vmem %s0, %s35
  %s37 = sadd.s32 0, 0
  %p38 = scmp.lt.s32.totalorder %s37, 0
  %s39 = scalar_select %p38, %s37, 0
  %s40 = smul.addr %s39, 16
  %s41 = scalar_lea.vmem %s1, %s40
  %s42 = sadd.s32 0, 0
  %p43 = scmp.lt.s32.totalorder %s42, 0
  %s44 = scalar_select %p43, %s42, 0
  %s45 = smul.addr %s44, 16
  %s46 = scalar_lea.vmem %s2, %s45
  %s47 = sadd.s32 0, 0
  %p48 = scmp.lt.s32.totalorder %s47, 0
  %s49 = scalar_select %p48, %s47, 0
  %s50 = smul.addr %s49, 16
  %s51 = scalar_lea.vmem %s0, %s50
  %s52 = sadd.s32 0, 0
  %s53 = sadd.s32 0, 0
  %p54 = scmp.lt.s32.totalorder %s53, 0
  %s55 = scalar_select %p54, %s53, 0
  %s56 = smul.addr %s55, 16
  %s57 = scalar_lea.vmem %s1, %s56
  %s58 = sadd.s32 0, 0
  %s59 = sadd.s32 0, 0
  %p60 = scmp.lt.s32.totalorder %s59, 0
  %s61 = scalar_select %p60, %s59, 0
  %s62 = smul.addr %s61, 16
  %s63 = scalar_lea.vmem %s2, %s62
  %s64 = sadd.s32 0, 0
  %p65 = scmp.eq.s32.totalorder 0, 0
  // Predicated region
  $region14: #{_loss.1} parent=0 // pred_check
    %p66 = pneg %p65
  $region15: #{_loss.1} parent=0 // pred_check_branch
    %68 = sbr.rel (%p66) target = $region17
  $region16: #{_loss.1} parent=0 // pred_region
    %69 = vst [vmem:[%s3] sm:$0xff] 0.0
    %70 = vst [vmem:[%s3 + $0x8] sm:$0xff] 0.0
  $region17: #{_loss.1} parent=0 // pred_fallthru
    _
  %v71 = vld [vmem:[%s51] sm:$0xff]
  %v72 = vld [vmem:[%s51 + $0x8] sm:$0xff]
  %v73 = vld [vmem:[%s57] sm:$0xff]
  %v74 = vld [vmem:[%s57 + $0x8] sm:$0xff]
  %v75 = vld [vmem:[%s63] sm:$0xff]
  %v76 = vld [vmem:[%s63 + $0x8] sm:$0xff]
  %v77 = vunpack.c.0.s8 %v75
  %v78 = vunpack.c.1.s8 %v75
  %v79 = vunpack.c.2.s8 %v75
  %v80 = vunpack.c.3.s8 %v75
  %v81 = vunpack.c.0.s8 %v76
  %v82 = vunpack.c.1.s8 %v76
  %v83 = vunpack.c.2.s8 %v76
  %v84 = vunpack.c.3.s8 %v76
  %v85 = vcvt.s32.f32 %v77
  %v86 = vcvt.s32.f32 %v78
  %v87 = vcvt.s32.f32 %v79
  %v88 = vcvt.s32.f32 %v80
  %v89 = vcvt.s32.f32 %v81
  %v90 = vcvt.s32.f32 %v82
  %v91 = vcvt.s32.f32 %v83
  %v92 = vcvt.s32.f32 %v84
  %v93 = vsub.f32 %v71, %v73
  %v94 = vsub.f32 %v72, %v74
  %v98 = vunpack.c.l.s4 286326784
  %v99 = vunpack.c.0.s8 %v98
  %v100 = vlaneseq
  %v101 = vshrl.u32 %v100, 7
  %v102 = vsub.s32 %v99, %v101
  %v103 = vrot.slane %v93, %v102
  %v105 = vunpack.c.l.s4 858989090
  %v106 = vunpack.c.0.s8 %v105
  %v107 = vlaneseq
  %v108 = vshrl.u32 %v107, 7
  %v109 = vsub.s32 %v106, %v108
  %v110 = vrot.slane %v93, %v109
  %v112 = vunpack.c.l.s4 1431651396
  %v113 = vunpack.c.0.s8 %v112
  %v114 = vlaneseq
  %v115 = vshrl.u32 %v114, 7
  %v116 = vsub.s32 %v113, %v115
  %v117 = vrot.slane %v93, %v116
  %v119 = vunpack.c.l.s4 2004313702
  %v120 = vunpack.c.0.s8 %v119
  %v121 = vlaneseq
  %v122 = vshrl.u32 %v121, 7
  %v123 = vsub.s32 %v120, %v122
  %v124 = vrot.slane %v93, %v123
  %v126 = vunpack.c.l.s4 286326784
  %v127 = vunpack.c.0.s8 %v126
  %v128 = vlaneseq
  %v129 = vshrl.u32 %v128, 7
  %v130 = vsub.s32 %v127, %v129
  %v131 = vrot.slane %v94, %v130
  %v133 = vunpack.c.l.s4 858989090
  %v134 = vunpack.c.0.s8 %v133
  %v135 = vlaneseq
  %v136 = vshrl.u32 %v135, 7
  %v137 = vsub.s32 %v134, %v136
  %v138 = vrot.slane %v94, %v137
  %v140 = vunpack.c.l.s4 1431651396
  %v141 = vunpack.c.0.s8 %v140
  %v142 = vlaneseq
  %v143 = vshrl.u32 %v142, 7
  %v144 = vsub.s32 %v141, %v143
  %v145 = vrot.slane %v94, %v144
  %v147 = vunpack.c.l.s4 2004313702
  %v148 = vunpack.c.0.s8 %v147
  %v149 = vlaneseq
  %v150 = vshrl.u32 %v149, 7
  %v151 = vsub.s32 %v148, %v150
  %v152 = vrot.slane %v94, %v151
  %v161 = vmul.f32 %v85, %v103
  %v162 = vmul.f32 %v86, %v110
  %v163 = vmul.f32 %v87, %v117
  %v164 = vmul.f32 %v88, %v124
  %v165 = vmul.f32 %v89, %v131
  %v166 = vmul.f32 %v90, %v138
  %v167 = vmul.f32 %v91, %v145
  %v168 = vmul.f32 %v92, %v152
  %v169 = vmul.f32 %v161, %v103
  %v170 = vmul.f32 %v162, %v110
  %v171 = vmul.f32 %v163, %v117
  %v172 = vmul.f32 %v164, %v124
  %v173 = vmul.f32 %v165, %v131
  %v174 = vmul.f32 %v166, %v138
  %v175 = vmul.f32 %v167, %v145
  %v176 = vmul.f32 %v168, %v152
  %v177 = vadd.f32 %v169, 0.0
  %v178 = vadd.f32 %v170, 0.0
  %v179 = vadd.f32 %v171, 0.0
  %v180 = vadd.f32 %v172, 0.0
  %v181 = vadd.f32 %v173, 0.0
  %v182 = vadd.f32 %v174, 0.0
  %v183 = vadd.f32 %v175, 0.0
  %v184 = vadd.f32 %v176, 0.0
  %v185 = vld [vmem:[%s3] sm:$0xff]
  %v186 = vld [vmem:[%s3 + $0x8] sm:$0xff]
  %v196 = vunpack.c.l.s4 1966171168
  %v197 = vunpack.c.0.s8 %v196
  %v198 = vlaneseq
  %v199 = vshrl.u32 %v198, 7
  %v200 = vsub.s32 %v197, %v199
  %v201 = vrot.slane %v177, %v200
  %v203 = vunpack.c.l.s4 1966171168
  %v204 = vunpack.c.0.s8 %v203
  %v205 = vlaneseq
  %v206 = vshrl.u32 %v205, 7
  %v207 = vsub.s32 %v204, %v206
  %v208 = vrot.slane %v178, %v207
  %v210 = vunpack.c.l.s4 1966171168
  %v211 = vunpack.c.0.s8 %v210
  %v212 = vlaneseq
  %v213 = vshrl.u32 %v212, 7
  %v214 = vsub.s32 %v211, %v213
  %v215 = vrot.slane %v179, %v214
  %v217 = vunpack.c.l.s4 1966171168
  %v218 = vunpack.c.0.s8 %v217
  %v219 = vlaneseq
  %v220 = vshrl.u32 %v219, 7
  %v221 = vsub.s32 %v218, %v220
  %v222 = vrot.slane %v180, %v221
  %v223 = vcombine.low %v201, %v208
  %v224 = vcombine.low %v215, %v222
  %v226 = vunpack.c.l.s4 1966171168
  %v227 = vunpack.c.0.s8 %v226
  %v228 = vlaneseq
  %v229 = vshrl.u32 %v228, 7
  %v230 = vsub.s32 %v227, %v229
  %v231 = vrot.slane %v223, %v230
  %v233 = vunpack.c.l.s4 1966171168
  %v234 = vunpack.c.0.s8 %v233
  %v235 = vlaneseq
  %v236 = vshrl.u32 %v235, 7
  %v237 = vsub.s32 %v234, %v236
  %v238 = vrot.slane %v224, %v237
  %v239 = vcombine.low %v231, %v238
  %v241 = vunpack.c.l.s4 1966171168
  %v242 = vunpack.c.0.s8 %v241
  %v243 = vlaneseq
  %v244 = vshrl.u32 %v243, 7
  %v245 = vsub.s32 %v242, %v244
  %v246 = vrot.slane %v181, %v245
  %v248 = vunpack.c.l.s4 1966171168
  %v249 = vunpack.c.0.s8 %v248
  %v250 = vlaneseq
  %v251 = vshrl.u32 %v250, 7
  %v252 = vsub.s32 %v249, %v251
  %v253 = vrot.slane %v182, %v252
  %v255 = vunpack.c.l.s4 1966171168
  %v256 = vunpack.c.0.s8 %v255
  %v257 = vlaneseq
  %v258 = vshrl.u32 %v257, 7
  %v259 = vsub.s32 %v256, %v258
  %v260 = vrot.slane %v183, %v259
  %v262 = vunpack.c.l.s4 1966171168
  %v263 = vunpack.c.0.s8 %v262
  %v264 = vlaneseq
  %v265 = vshrl.u32 %v264, 7
  %v266 = vsub.s32 %v263, %v265
  %v267 = vrot.slane %v184, %v266
  %v268 = vcombine.low %v246, %v253
  %v269 = vcombine.low %v260, %v267
  %v271 = vunpack.c.l.s4 1966171168
  %v272 = vunpack.c.0.s8 %v271
  %v273 = vlaneseq
  %v274 = vshrl.u32 %v273, 7
  %v275 = vsub.s32 %v272, %v274
  %v276 = vrot.slane %v268, %v275
  %v278 = vunpack.c.l.s4 1966171168
  %v279 = vunpack.c.0.s8 %v278
  %v280 = vlaneseq
  %v281 = vshrl.u32 %v280, 7
  %v282 = vsub.s32 %v279, %v281
  %v283 = vrot.slane %v269, %v282
  %v284 = vcombine.low %v276, %v283
  %v287 = vadd.f32 %v185, %v239
  %v288 = vadd.f32 %v186, %v284
  %289 = vst [vmem:[%s3] sm:$0xff] %v287
  %290 = vst [vmem:[%s3 + $0x8] sm:$0xff] %v288
  // Predicated region
  $region18: #{_loss.1} parent=0 // pred_check
    _
  $region19: #{_loss.1} parent=0 // pred_check_branch
    %292 = sbr.rel (0) target = $region21
  $region20: #{_loss.1} parent=0 // pred_region
    _
  $region21: #{_loss.1} parent=0 // pred_fallthru
    _
  // Predicated region
  $region22: #{_loss.1} parent=0 // pred_check
    _
  $region23: #{_loss.1} parent=0 // pred_check_branch
    %294 = sbr.rel (0) target = $region25
  $region24: #{_loss.1} parent=0 // pred_region
    _
  $region25: #{_loss.1} parent=0 // pred_fallthru
    _

</llo_original>
